<compile_context>
chip_gen: v7x
topology: tpu7x:2x2x1
jax: 0.10.0
libtpu: 0.0.40
codegen_flags: <defaults>
</compile_context>

<pallas_src>
import functools
from typing import NamedTuple

import jax
import jax.numpy as jnp
import numpy as np
from jax.experimental import pallas as pl
from jax.experimental.pallas import tpu as pltpu


def _round_up(x, m):
    return ((x + m - 1) // m) * m


@functools.lru_cache(maxsize=None)
def _vmem_capacity_bytes():
    try:
        return int(pltpu.get_tpu_info().vmem_capacity_bytes)
    except Exception:
        return 128 * 1024 * 1024  # v5e / v6e physical VMEM


@functools.lru_cache(maxsize=None)
def _prefill_tile_targets():
    """(tm, tn, tk) targets, keyed on the chip's VMEM capacity (generation proxy)."""
    cap = _vmem_capacity_bytes()
    if cap <= 80 * 1024 * 1024:
        # v7x: 64 MiB VMEM, 2 TensorCores sharing HBM -> 768-square tiles, ~384 FLOP/B.
        return 768, 768, 1024
    # v5e / v6e: 128 MiB VMEM.  1024-square gives ~512 FLOP/B (compute-bound on v5e).
    # TODO(synk): v6e ideally wants 1280-1536 square tiles (>~656 FLOP/B threshold);
    # bump once v5e/v6e can be distinguished from get_tpu_info().
    return 1024, 1024, 1024


def _decode_tiles(K, O):
    """Wide, lane-dense weight blocks for the weight-streaming (decode) path."""
    Kn, On = _round_up(K, 128), _round_up(O, 128)
    tn = min(2048, On)
    # Keep >=2 blocks along O when O allows so both v7x TensorCores get work.
    if On > 128 and On // tn < 2:
        tn = max(128, _round_up((On + 1) // 2, 128))
    tk = min(2048, Kn)
    return tn, tk


def _vmem_limit_bytes(tm, tn, tk, out_itemsize, use_scratch):
    need = (2 * (tm * tk + tk * tn) * 2            # double-buffered bf16 input tiles
            + 2 * tm * tn * out_itemsize)          # double-buffered output tile
    if use_scratch:
        need += tm * tn * 4                        # f32 accumulator scratch
    cap = int(0.8 * _vmem_capacity_bytes())        # generation-aware cap (not fixed 56 MiB)
    return int(min(max(int(1.5 * need), 32 * 1024 * 1024), cap))


# ---------------------------------------------------------------------------
# Pallas kernels: tiled y = x @ Wt  (the hot path of CustomMLPLayer.forward)
#   x tile: (tm, tk)   Wt tile: (tk, tn)   out tile: (tm, tn)
# ---------------------------------------------------------------------------
def _matmul_kernel_accout(x_ref, w_ref, o_ref):
    # f32 output doubles as the accumulator: the output BlockSpec ignores the k axis,
    # so this tile is VMEM-resident across the whole reduction (no scratch, no copy).
    @pl.when(pl.program_id(2) == 0)
    def _init():
        o_ref[...] = jnp.zeros_like(o_ref)

    o_ref[...] += jnp.dot(x_ref[...], w_ref[...], preferred_element_type=jnp.float32)


def _matmul_kernel_scratch(x_ref, w_ref, o_ref, acc_ref):
    # Used when the requested output dtype is narrower than f32 (e.g. bf16 outputs).
    @pl.when(pl.program_id(2) == 0)
    def _init():
        acc_ref[...] = jnp.zeros_like(acc_ref)

    acc_ref[...] += jnp.dot(x_ref[...], w_ref[...], preferred_element_type=jnp.float32)

    @pl.when(pl.program_id(2) == pl.num_programs(2) - 1)
    def _store():
        o_ref[...] = acc_ref[...].astype(o_ref.dtype)


@functools.partial(jax.jit, static_argnames=("tm", "tn", "tk", "o_true", "out_dtype"))
def _matmul_xwt_padded(x2d, w_pad, *, tm, tn, tk, o_true, out_dtype):
    """y[:M, :o_true] = x2d @ w_pad[:K, :o_true].

    x2d:   (M, K) any float dtype (cast to bf16 here; cheap vs. the weight stream).
    w_pad: (Kp, Op) bf16, already zero-padded so Kp % tk == 0 and Op % tn == 0.
    """
    M, K = x2d.shape
    Kp, Op = w_pad.shape
    assert Kp % tk == 0 and Op % tn == 0, (Kp, Op, tk, tn)
    Mp = _round_up(M, tm)

    xc = x2d.astype(jnp.bfloat16)
    if (Mp, Kp) != (M, K):
        xc = jnp.pad(xc, ((0, Mp - M), (0, Kp - K)))

    out_itemsize = np.dtype(out_dtype).itemsize
    use_scratch = np.dtype(out_dtype) != np.dtype(jnp.float32)
    kernel = _matmul_kernel_scratch if use_scratch else _matmul_kernel_accout
    scratch = (pltpu.VMEM((tm, tn), jnp.float32),) if use_scratch else ()

    grid = (Mp // tm, Op // tn, Kp // tk)
    out = pl.pallas_call(
        kernel,
        out_shape=jax.ShapeDtypeStruct((Mp, Op), out_dtype),
        grid_spec=pltpu.PrefetchScalarGridSpec(
            num_scalar_prefetch=0,
            grid=grid,
            in_specs=[
                pl.BlockSpec((tm, tk), lambda i, j, k: (i, k)),
                pl.BlockSpec((tk, tn), lambda i, j, k: (k, j)),
            ],
            out_specs=pl.BlockSpec((tm, tn), lambda i, j, k: (i, j)),
            scratch_shapes=scratch,
        ),
        compiler_params=pltpu.CompilerParams(
            dimension_semantics=("parallel", "parallel", "arbitrary"),
            vmem_limit_bytes=_vmem_limit_bytes(tm, tn, tk, out_itemsize, use_scratch),
        ),
        cost_estimate=pl.CostEstimate(
            flops=2 * Mp * Op * Kp,
            transcendentals=0,
            # Panel re-reads: x re-read once per output-column block, w once per row block.
            bytes_accessed=(Mp * Kp * (Op // tn) * 2
                            + Kp * Op * (Mp // tm) * 2
                            + Mp * Op * out_itemsize),
        ),
    )(xc, w_pad)

    if (Mp, Op) != (M, o_true):
        out = out[:M, :o_true]
    return out


# ---------------------------------------------------------------------------
# Weight preparation (once, off the per-call path) + wrapper
# ---------------------------------------------------------------------------
class PreparedWeight(NamedTuple):
    """bf16 W^T, zero-padded once to the tile grid of its execution path."""
    w_pad: jax.Array   # (Kp, Op) bf16
    K: int
    O: int
    tn: int
    tk: int


def prepare_weight_t(w_t, *, decode):
    """Cast W^T to bf16 and pad to tile multiples ONCE (no per-call cast/pad of weights)."""
    K, O = w_t.shape
    if decode:
        tn, tk = _decode_tiles(K, O)
    else:
        _, tn_t, tk_t = _prefill_tile_targets()
        tn = min(tn_t, _round_up(O, 128))
        tk = min(tk_t, _round_up(K, 128))
    Kp, Op = _round_up(K, tk), _round_up(O, tn)
    w_pad = jnp.asarray(w_t, dtype=jnp.bfloat16)
    if (Kp, Op) != (K, O):
        w_pad = jnp.pad(w_pad, ((0, Kp - K), (0, Op - O)))
    return PreparedWeight(w_pad=w_pad, K=K, O=O, tn=tn, tk=tk)


def linear_xwt(x, prep, *, out_dtype=None):
    """x:(B,S,K) @ W.T -> (B,S,O) using a prepared (bf16, pre-padded) W^T."""
    B, S, K = x.shape
    if K != prep.K:
        raise ValueError(f"feature mismatch: x has {K}, weight expects {prep.K}")
    M = B * S
    out_dtype = np.dtype(x.dtype if out_dtype is None else out_dtype)
    tm_target, _, _ = _prefill_tile_targets()
    tm = min(tm_target, _round_up(M, 8))   # decode (tiny M) naturally clamps to 8/16
    y2d = _matmul_xwt_padded(x.reshape(M, K), prep.w_pad, tm=tm, tn=prep.tn,
                             tk=prep.tk, o_true=prep.O, out_dtype=out_dtype)
    return y2d.reshape(B, S, prep.O)


# ---------------------------------------------------------------------------
# SIOT bookkeeping of CustomMLPLayer (cheap glue; the matmuls above are the hot path)
# ---------------------------------------------------------------------------
@functools.partial(
    jax.jit, static_argnames=("base_neuron_num", "n_extra", "original_neurons_num"))
def select_down_indices(squeezed_x, *, base_neuron_num, n_extra, original_neurons_num):
    """Static-shape replacement for the 'down' prefill branch that builds `indices_all`."""
    base_neurons = jnp.arange(base_neuron_num, dtype=jnp.int32)
    if n_extra <= 0:
        return base_neurons
    # TODO(synk): exact semantics of convert `common.get_core_neurons` are unavailable here;
    # approximated by ranking neurons by summed |activation| over all tokens.
    scores = jnp.sum(
        jnp.abs(squeezed_x.reshape(-1, original_neurons_num).astype(jnp.float32)), axis=0)
    scores = scores.at[:base_neuron_num].set(-jnp.inf)   # exclude base prefix
    _, extra = jax.lax.top_k(scores, n_extra)
    return jnp.concatenate([base_neurons, extra.astype(jnp.int32)])


class CustomMLPLayerJAX:
    """JAX/Pallas port of CustomMLPLayer's forward math.

    Prefill (full weight) and decode (filtered weight) matmuls run in the Pallas MXU
    kernel; neuron selection / weight filtering is functional glue (the original
    in-place `reorder_tensor` + slice == gather of the selected neurons).
    """

    def __init__(self, weight, *, name, sparsity, token_sparsity,
                 original_neurons_num, siot_method_config):
        weight = jnp.asarray(weight)                # (out_features, in_features)
        self.name = name
        self.sparsity = sparsity
        self.token_sparsity = token_sparsity
        self.original_neurons_num = original_neurons_num
        self.base_neurons_percent = siot_method_config["base_neurons_percent"]

        neuron_num = round(original_neurons_num * sparsity)
        loaded = weight.shape[1] if "down" in name else weight.shape[0]
        if neuron_num > loaded:
            raise RuntimeError("Number of required neurons is larger than loaded")
        if self.base_neurons_percent > sparsity:
            raise RuntimeError("base_neurons_percent is larger than sparsity")
        self.neuron_num = neuron_num
        self.base_neuron_num = int(self.base_neurons_percent * original_neurons_num)
        self.n_extra = max(neuron_num - self.base_neuron_num, 0)

        # bf16 weight materialized ONCE: unpadded transpose for gathers + a tile-padded
        # copy for the prefill matmul.  No per-call weight cast/pad anywhere.
        self.w_t_bf16 = jnp.asarray(weight.T, dtype=jnp.bfloat16)    # (in, out)
        self.w_prefill = prepare_weight_t(self.w_t_bf16, decode=False)

        self.indices_all = None
        self.w_decode = None     # PreparedWeight for the filtered (decode) matmul

    def forward(self, x):
        return self.forward_prefill(x) if x.shape[1] > 1 else self.forward_decode(x)

    # ---- prefill path (x.size(1) > 1): true_value = x @ W.T ----
    def forward_prefill(self, x):
        true_value = linear_xwt(x, self.w_prefill)
        if "down" in self.name:
            squeezed_x = jnp.squeeze(x)
            self.indices_all = select_down_indices(
                squeezed_x,
                base_neuron_num=self.base_neuron_num,
                n_extra=self.n_extra,
                original_neurons_num=self.original_neurons_num)
            # weight[:, indices] (PyTorch layout) == row-gather of W^T; built once per
            # prefill (already bf16, then pre-padded) and amortized over decode steps.
            self.w_decode = prepare_weight_t(
                jnp.take(self.w_t_bf16, self.indices_all, axis=0), decode=True)
        return true_value

    # ---- mirrors the decode-time indices_list_all handoff for gate/up layers ----
    def set_decode_indices(self, indices):
        self.indices_all = indices
        # weight[indices, :] (PyTorch layout) == column-gather of W^T.
        self.w_decode = prepare_weight_t(
            jnp.take(self.w_t_bf16, indices, axis=1), decode=True)

    # ---- decode path (x.size(1) == 1): true_value = x @ filtered_W.T ----
    def forward_decode(self, x):
        if self.w_decode is None:
            raise RuntimeError("decode called before the filtered weight was built")
        return linear_xwt(x, self.w_decode)


def _bf16_ref_linear(x, w):
    """f32 einsum on bf16-rounded operands; mirrors the kernel's MXU math."""
    xb = x.astype(jnp.bfloat16).astype(jnp.float32)
    wb = jnp.asarray(w).astype(jnp.bfloat16).astype(jnp.float32)
    return jnp.einsum("bsk,ok->bso", xb, wb, precision=jax.lax.Precision.HIGHEST)


# ---------------------------------------------------------------------------
if __name__ == "__main__":
    key = jax.random.PRNGKey(0)
    k1, k2, k3, k4 = jax.random.split(key, 4)

    B, S, H, I = 2, 8, 128, 256          # batch, seq, hidden, intermediate
    siot_cfg = {"base_neurons_percent": 0.25}
    sparsity, token_sparsity = 0.5, 0.2

    w_up = jax.random.normal(k1, (I, H), jnp.float32) * 0.02    # up_proj.weight
    w_down = jax.random.normal(k2, (H, I), jnp.float32) * 0.02  # down_proj.weight
    x = jax.random.normal(k3, (B, S, H), jnp.float32)

    up_layer = CustomMLPLayerJAX(w_up, name="up_proj", sparsity=sparsity,
                                 token_sparsity=token_sparsity,
                                 original_neurons_num=I, siot_method_config=siot_cfg)
    down_layer = CustomMLPLayerJAX(w_down, name="down_proj", sparsity=sparsity,
                                   token_sparsity=token_sparsity,
                                   original_neurons_num=I, siot_method_config=siot_cfg)

    # ---- prefill (x.size(1) > 1): true_value = x @ W.T ----
    up_out = up_layer.forward(x)                  # (B, S, I)
    down_out = down_layer.forward(up_out)         # (B, S, H)
    jax.block_until_ready(down_out)

    ref_up = _bf16_ref_linear(x, w_up)
    ref_down = _bf16_ref_linear(up_out, w_down)
    assert up_out.shape == (B, S, I)
    assert jnp.allclose(up_out, ref_up, atol=2e-3, rtol=2e-3)
    assert jnp.allclose(down_out, ref_down, atol=2e-3, rtol=2e-3)

    # ---- decode (x.size(1) == 1): true_value = x @ filtered_W.T ----
    up_layer.set_decode_indices(down_layer.indices_all)   # indices_list_all handoff
    x_dec = jax.random.normal(k4, (B, 1, H), jnp.float32)
    up_dec = up_layer.forward(x_dec)              # (B, 1, neuron_num)
    down_dec = down_layer.forward(up_dec)         # (B, 1, H)
    jax.block_until_ready(down_dec)

    idx = down_layer.indices_all
    ref_up_dec = _bf16_ref_linear(x_dec, w_up[idx, :])
    ref_down_dec = _bf16_ref_linear(up_dec, w_down[:, idx])
    assert up_dec.shape == (B, 1, up_layer.neuron_num)
    assert jnp.allclose(up_dec, ref_up_dec, atol=2e-3, rtol=2e-3)
    assert jnp.allclose(down_dec, ref_down_dec, atol=2e-3, rtol=2e-3)

    print("KERNEL_OK")
</pallas_src>

<mosaic_0001>
module attributes {stable_mosaic.version = 11 : i64} {
  func.func @_matmul_kernel_accout(%arg0: i32, %arg1: i32, %arg2: i32, %arg3: memref<16x128xbf16, #tpu.memory_space<vmem>>, %arg4: memref<128x256xbf16, #tpu.memory_space<vmem>>, %arg5: memref<16x256xf32, #tpu.memory_space<vmem>>) attributes {dimension_semantics = [#tpu.dimension_semantics<parallel>, #tpu.dimension_semantics<parallel>, #tpu.dimension_semantics<arbitrary>], iteration_bounds = array<i64: 1, 1, 1>, scalar_prefetch = 0 : i64, scratch_operands = 0 : i64, tpu.core_type = #tpu.core_type<tc>, window_params = [{transform_indices = @transform_0, window_bounds = array<i64: 16, 128>}, {transform_indices = @transform_1, window_bounds = array<i64: 128, 256>}, {transform_indices = @transform_2, window_bounds = array<i64: 16, 256>}]} {
    %c0_i32 = arith.constant 0 : i32
    %0 = arith.cmpi eq, %arg2, %c0_i32 : i32
    %1 = arith.extui %0 : i1 to i32
    %c0_i32_0 = arith.constant 0 : i32
    %2 = arith.cmpi ne, %1, %c0_i32_0 : i32
    scf.if %2 {
      %cst_8 = arith.constant 0.000000e+00 : f32
      %9 = vector.broadcast %cst_8 : f32 to vector<16x256xf32>
      %c0_9 = arith.constant 0 : index
      %c0_10 = arith.constant 0 : index
      %10 = vector.load %arg5[%c0_9, %c0_10] : memref<16x256xf32, #tpu.memory_space<vmem>>, vector<16x256xf32>
      tpu.vector_store %arg5[%c0_9, %c0_10], %9 {strides = array<i32>} : memref<16x256xf32, #tpu.memory_space<vmem>>, vector<16x256xf32>,
    } else {
    }
    %c0 = arith.constant 0 : index
    %c0_1 = arith.constant 0 : index
    %3 = vector.load %arg5[%c0, %c0_1] : memref<16x256xf32, #tpu.memory_space<vmem>>, vector<16x256xf32>
    %c0_2 = arith.constant 0 : index
    %c0_3 = arith.constant 0 : index
    %4 = vector.load %arg3[%c0_2, %c0_3] : memref<16x128xbf16, #tpu.memory_space<vmem>>, vector<16x128xbf16>
    %c0_4 = arith.constant 0 : index
    %c0_5 = arith.constant 0 : index
    %5 = vector.load %arg4[%c0_4, %c0_5] : memref<128x256xbf16, #tpu.memory_space<vmem>>, vector<128x256xbf16>
    %cst = arith.constant dense<0.000000e+00> : vector<16x256xf32>
    %6 = tpu.matmul %4, %5, %cst {dimension_numbers = #tpu.dot_dimension_numbers<[1], [0], [0], [1], [0, 0, 1, 1], [], []>} : vector<16x128xbf16>, vector<128x256xbf16>, vector<16x256xf32> -> vector<16x256xf32>
    %7 = arith.addf %3, %6 : vector<16x256xf32>
    %c0_6 = arith.constant 0 : index
    %c0_7 = arith.constant 0 : index
    %8 = vector.load %arg5[%c0_6, %c0_7] : memref<16x256xf32, #tpu.memory_space<vmem>>, vector<16x256xf32>
    tpu.vector_store %arg5[%c0_6, %c0_7], %7 {strides = array<i32>} : memref<16x256xf32, #tpu.memory_space<vmem>>, vector<16x256xf32>,
    return
  }
  func.func @transform_0(%arg0: i32, %arg1: i32, %arg2: i32) -> (i32, i32) {
    %c0_i32 = arith.constant 0 : i32
    return %arg0, %arg2 : i32, i32
  }
  func.func @transform_1(%arg0: i32, %arg1: i32, %arg2: i32) -> (i32, i32) {
    %c0_i32 = arith.constant 0 : i32
    return %arg2, %arg1 : i32, i32
  }
  func.func @transform_2(%arg0: i32, %arg1: i32, %arg2: i32) -> (i32, i32) {
    %c0_i32 = arith.constant 0 : i32
    return %arg0, %arg1 : i32, i32
  }
}

</mosaic_0001>

<llo_original>
// kernel: _matmul_xwt_padded.1
$region0: #{_matmul_xwt_padded.1}
  #allocation0 [shape = 'u32[]', space=smem, size = 0x4, offset = 0x4, fixed_abs, tag = 'smem constant byte address 0x4 - core index']
  #allocation1 [shape = 'u32[144,128]{1,0:T(1,128)}', space=vmem, size = 0x12000, scoped, tag = 'internal scratch']
  %s0 = inlined_call_operand.vmem [shape: bf16[16,128], index: 0, kind: input, shape index: {}]
  %s1 = inlined_call_operand.hbm [shape: bf16[128,256], index: 1, kind: input, shape index: {}]
  %s2 = inlined_call_operand.hbm [shape: f32[16,256], index: 2, kind: output, shape index: {}]
  %s3 = sld [smem:[#allocation0]]
  $region26: #{_matmul_xwt_padded.1} parent=0
    _
  %s5 = ssub.s32 1, %s3
  %s6 = scalar_select 0, %s5, %s3
  $region1: #{_matmul_xwt_padded.1} parent=0
    #allocation2 [shape = 'u8[65536]{0}', space=vmem, size = 0x10000, scoped, tag = 'input window, operand 1, single buffered']
    #allocation3 [shape = 's32[1]{0}', space=sflag, size = 0x4, scoped, tag = 'scoped memory for _matmul_xwt_padded.1']
    #allocation4 [shape = 's32[1]{0}', space=sflag, size = 0x4, scoped, tag = 'scoped memory for _matmul_xwt_padded.1']
    #allocation5 [shape = 'u8[16384]{0}', space=vmem, size = 0x4000, scoped, tag = 'output window, operand 0, single buffered']
    %7 = vsyncpa [#allocation3], 0
    %8 = vsyncpa [#allocation4], 0
    // Predicated region
    $region2: #{_matmul_xwt_padded.1} parent=1 // pred_check
      _
    $region3: #{_matmul_xwt_padded.1} parent=1 // pred_check_branch
      %10 = sbr.rel (0) target = $region5
    $region4: #{_matmul_xwt_padded.1} parent=1 // pred_region
      _
    $region5: #{_matmul_xwt_padded.1} parent=1 // pred_fallthru
      _
    // Predicated region
    $region6: #{_matmul_xwt_padded.1} parent=1 // pred_check
      _
    $region7: #{_matmul_xwt_padded.1} parent=1 // pred_check_branch
      %12 = sbr.rel (0) target = $region9
    $region8: #{_matmul_xwt_padded.1} parent=1 // pred_region
      %s14 = ssub.s32 2048, 2048
      %15 = vsyncadd [#allocation3], %s14
      %s16 = sshll.u32 [#allocation2], 4
      %s17 = int_to_ptr.vmem [resolvable:$true] %s16
      %22 = dma.hbm_to_vmem [thread:$0]  %s1, 2048, %s17, [#allocation3], 128, 128, 8
    $region9: #{_matmul_xwt_padded.1} parent=1 // pred_fallthru
      _
    // Predicated region
    $region10: #{_matmul_xwt_padded.1} parent=1 // pred_check
      _
    $region11: #{_matmul_xwt_padded.1} parent=1 // pred_check_branch
      %24 = sbr.rel (0) target = $region13
    $region12: #{_matmul_xwt_padded.1} parent=1 // pred_region
      %25 = dma.done [#allocation3], 2048
    $region13: #{_matmul_xwt_padded.1} parent=1 // pred_fallthru
      _
    %p27 = scmp.eq.s32.totalorder 0, 0
    // Predicated region
    $region14: #{_matmul_xwt_padded.1} parent=1 // pred_check
      %p28 = pneg %p27
    $region15: #{_matmul_xwt_padded.1} parent=1 // pred_check_branch
      %30 = sbr.rel (%p28) target = $region17
    $region16: #{_matmul_xwt_padded.1} parent=1 // pred_region
      %31 = vst [vmem:[#allocation5] sm:$0xff] 0.0
      %32 = vst [vmem:[#allocation5 + $0x8] sm:$0xff] 0.0
      %33 = vst [vmem:[#allocation5 + $0x10] sm:$0xff] 0.0
      %34 = vst [vmem:[#allocation5 + $0x18] sm:$0xff] 0.0
    $region17: #{_matmul_xwt_padded.1} parent=1 // pred_fallthru
      _
    %v35 = vld [vmem:[#allocation5] sm:$0xff]
    %v36 = vld [vmem:[#allocation5 + $0x8] sm:$0xff]
    %v37 = vld [vmem:[#allocation5 + $0x10] sm:$0xff]
    %v38 = vld [vmem:[#allocation5 + $0x18] sm:$0xff]
    %v39 = vld [vmem:[%s0] sm:$0xf]
    %v40 = vld [vmem:[%s0 + $0x4] sm:$0xf]
    %v41 = vld [vmem:[#allocation2] sm:$0xff]
    %v42 = vld [vmem:[#allocation2 + $0x8] sm:$0xff]
    %v43 = vld [vmem:[#allocation2 + $0x10] sm:$0xff]
    %v44 = vld [vmem:[#allocation2 + $0x18] sm:$0xff]
    %v45 = vld [vmem:[#allocation2 + $0x20] sm:$0xff]
    %v46 = vld [vmem:[#allocation2 + $0x28] sm:$0xff]
    %v47 = vld [vmem:[#allocation2 + $0x30] sm:$0xff]
    %v48 = vld [vmem:[#allocation2 + $0x38] sm:$0xff]
    %v49 = vld [vmem:[#allocation2 + $0x40] sm:$0xff]
    %v50 = vld [vmem:[#allocation2 + $0x48] sm:$0xff]
    %v51 = vld [vmem:[#allocation2 + $0x50] sm:$0xff]
    %v52 = vld [vmem:[#allocation2 + $0x58] sm:$0xff]
    %v53 = vld [vmem:[#allocation2 + $0x60] sm:$0xff]
    %v54 = vld [vmem:[#allocation2 + $0x68] sm:$0xff]
    %v55 = vld [vmem:[#allocation2 + $0x70] sm:$0xff]
    %v56 = vld [vmem:[#allocation2 + $0x78] sm:$0xff]
    %v59 = vunpack.c.l.b16 %v39
    %v60 = vunpack.c.l.b16 %v40
    %v61 = vpack.c.b16 %v60, %v59
    %v79 = vunpack.c.l.b16 %v41
    %v80 = vunpack.c.h.b16 %v41
    %v81 = vunpack.c.l.b16 %v42
    %v82 = vunpack.c.h.b16 %v42
    %v83 = vunpack.c.l.b16 %v43
    %v84 = vunpack.c.h.b16 %v43
    %v85 = vunpack.c.l.b16 %v44
    %v86 = vunpack.c.h.b16 %v44
    %v87 = vunpack.c.l.b16 %v45
    %v88 = vunpack.c.h.b16 %v45
    %v89 = vunpack.c.l.b16 %v46
    %v90 = vunpack.c.h.b16 %v46
    %v91 = vunpack.c.l.b16 %v47
    %v92 = vunpack.c.h.b16 %v47
    %v93 = vunpack.c.l.b16 %v48
    %v94 = vunpack.c.h.b16 %v48
    %v95 = vunpack.c.l.b16 %v49
    %v96 = vunpack.c.h.b16 %v49
    %v97 = vunpack.c.l.b16 %v50
    %v98 = vunpack.c.h.b16 %v50
    %v99 = vunpack.c.l.b16 %v51
    %v100 = vunpack.c.h.b16 %v51
    %v101 = vunpack.c.l.b16 %v52
    %v102 = vunpack.c.h.b16 %v52
    %v103 = vunpack.c.l.b16 %v53
    %v104 = vunpack.c.h.b16 %v53
    %v105 = vunpack.c.l.b16 %v54
    %v106 = vunpack.c.h.b16 %v54
    %v107 = vunpack.c.l.b16 %v55
    %v108 = vunpack.c.h.b16 %v55
    %v109 = vunpack.c.l.b16 %v56
    %v110 = vunpack.c.h.b16 %v56
    %v111 = vpack.c.b16 %v81, %v79
    %v112 = vpack.c.b16 %v82, %v80
    %v113 = vpack.c.b16 %v85, %v83
    %v114 = vpack.c.b16 %v86, %v84
    %v115 = vpack.c.b16 %v89, %v87
    %v116 = vpack.c.b16 %v90, %v88
    %v117 = vpack.c.b16 %v93, %v91
    %v118 = vpack.c.b16 %v94, %v92
    %v119 = vpack.c.b16 %v97, %v95
    %v120 = vpack.c.b16 %v98, %v96
    %v121 = vpack.c.b16 %v101, %v99
    %v122 = vpack.c.b16 %v102, %v100
    %v123 = vpack.c.b16 %v105, %v103
    %v124 = vpack.c.b16 %v106, %v104
    %v125 = vpack.c.b16 %v109, %v107
    %v126 = vpack.c.b16 %v110, %v108
    %143 = vmatprep.subr.bf16.mxu0 %v112
    %144 = vmatpush1.bf16.msra.mxu0 %v111
    %145 = vmatprep.subr.bf16.mxu0 %v114
    %146 = vmatpush1.bf16.msra.mxu0 %v113
    %147 = vmatprep.subr.bf16.mxu0 %v116
    %148 = vmatpush1.bf16.msra.mxu0 %v115
    %149 = vmatprep.subr.bf16.mxu0 %v118
    %150 = vmatpush1.bf16.msra.mxu0 %v117
    %151 = vmatprep.subr.bf16.mxu0 %v120
    %152 = vmatpush1.bf16.msra.mxu0 %v119
    %153 = vmatprep.subr.bf16.mxu0 %v122
    %154 = vmatpush1.bf16.msra.mxu0 %v121
    %155 = vmatprep.subr.bf16.mxu0 %v124
    %156 = vmatpush1.bf16.msra.mxu0 %v123
    %157 = vmatprep.subr.bf16.mxu0 %v126
    %158 = vmatpush1.bf16.msra.mxu0 %v125
    %159 = vmatprep.subr.bf16.mxu0 0
    %160 = vmatpush1.bf16.msra.mxu0 0
    %161 = vmatprep.subr.bf16.mxu0 0
    %162 = vmatpush1.bf16.msra.mxu0 0
    %163 = vmatprep.subr.bf16.mxu0 0
    %164 = vmatpush1.bf16.msra.mxu0 0
    %165 = vmatprep.subr.bf16.mxu0 0
    %166 = vmatpush1.bf16.msra.mxu0 0
    %167 = vmatprep.subr.bf16.mxu0 0
    %168 = vmatpush1.bf16.msra.mxu0 0
    %169 = vmatprep.subr.bf16.mxu0 0
    %170 = vmatpush1.bf16.msra.mxu0 0
    %171 = vmatprep.subr.bf16.mxu0 0
    %172 = vmatpush1.bf16.msra.mxu0 0
    %173 = vmatprep.subr.bf16.mxu0 0
    %174 = vmatpush1.bf16.msra.mxu0 0
    %175 = vmatprep.mubr.bf16.mxu0 0
    %176 = vmatmul.mubr.bf16.gmra.mrb[0].mxu0 %v61
    %v177 = vpop.f32.mrb[0].mxu0
    %v178 = vadd.f32 0.0, %v177
    %v179 = vpop.f32.mrb[0].mxu0
    %v180 = vadd.f32 0.0, %v179
    %v181 = vpop.f32.mrb[0].mxu0
    %v182 = vadd.f32 0.0, %v181
    %v183 = vpop.f32.mrb[0].mxu0
    %v184 = vadd.f32 0.0, %v183
    %185 = vdwg.mxu0
    %v186 = vadd.f32 %v35, %v178
    %v187 = vadd.f32 %v36, %v180
    %v188 = vadd.f32 %v37, %v182
    %v189 = vadd.f32 %v38, %v184
    %190 = vst [vmem:[#allocation5] sm:$0xff] %v186
    %191 = vst [vmem:[#allocation5 + $0x8] sm:$0xff] %v187
    %192 = vst [vmem:[#allocation5 + $0x10] sm:$0xff] %v188
    %193 = vst [vmem:[#allocation5 + $0x18] sm:$0xff] %v189
    // Predicated region
    $region18: #{_matmul_xwt_padded.1} parent=1 // pred_check
      _
    $region19: #{_matmul_xwt_padded.1} parent=1 // pred_check_branch
      %195 = sbr.rel (0) target = $region21
    $region20: #{_matmul_xwt_padded.1} parent=1 // pred_region
      %s197 = ssub.s32 512, 512
      %198 = vsyncadd [#allocation4], %s197
      %s199 = sshll.u32 [#allocation5], 4
      %s200 = int_to_ptr.vmem [resolvable:$true] %s199
      %205 = dma.vmem_to_hbm [thread:$0]  %s200, 512, %s2, [#allocation4], 256, 256, 16
    $region21: #{_matmul_xwt_padded.1} parent=1 // pred_fallthru
      _
    // Predicated region
    $region22: #{_matmul_xwt_padded.1} parent=1 // pred_check
      _
    $region23: #{_matmul_xwt_padded.1} parent=1 // pred_check_branch
      %207 = sbr.rel (0) target = $region25
    $region24: #{_matmul_xwt_padded.1} parent=1 // pred_region
      %208 = dma.done [#allocation4], 512
    $region25: #{_matmul_xwt_padded.1} parent=1 // pred_fallthru
      _
    %209 = vsyncpa [#allocation3], 1
    %210 = vsyncpa [#allocation4], 1

</llo_original>
